<compile_context>
chip_gen: v7x
topology: tpu7x:2x2x1
jax: 0.10.0
libtpu: 0.0.40
codegen_flags: <defaults>
</compile_context>

<pallas_src>
import functools

import numpy as np
import jax
import jax.numpy as jnp
from jax.experimental import pallas as pl
from jax.experimental.pallas import tpu as pltpu

_INV_SQRT2 = 0.7071067811865476
_BN_EPS = 1e-5
_NEG_BIG = -1e30   # reference-only pooling sentinel


# ------------------------------ fused kernel ---------------------------------

def _slidegraph_fused_kernel(
    x_ref, adj_ref, w_ref, s_ref, out_ref, nz_ref,
    *, blocks, segments, dim_target, eps_gin):
    """Whole SlideGraphGNN forward (3 layers) in one grid-less invocation.

    x_ref   : [N, F]    bf16 node features (pre-cast in the wrapper)
    adj_ref : [N, N]    bf16 dense adjacency, A[dst, src] = edge count
    w_ref   : [Rw, C]   bf16 packed weight slab (node-MLP weights with
                        Linear-bias + eval-BN folded in, classifier weights)
    s_ref   : [Rs, C]   f32 packed shift / classifier-bias slab
    out_ref : [G, T]    f32 pooled logits (sum over layers)
    nz_ref  : [N, T+D]  f32 lane-concat of (Z_sum, x_final)

    blocks   : per-layer static ints (w_off, din, dout, s_row, v_off, t_row)
    segments : per-graph static (start, count) contiguous node ranges
    """
    f32, bf16 = jnp.float32, jnp.bfloat16
    adj = adj_ref[...]

    def affine(lhs_bf16, w_off, din, dout, s_row):
        # bf16 MXU operands, f32 accumulation; shift add stays in f32.
        w = w_ref[w_off:w_off + din, 0:dout]
        shift = s_ref[s_row:s_row + 1, 0:dout]
        return jnp.dot(lhs_bf16, w, preferred_element_type=f32) + shift

    def gelu(v):                       # exact (erf) GELU, matches torch GELU()
        return 0.5 * v * (1.0 + jax.lax.erf(v * _INV_SQRT2))

    def pool_max(z):
        # global_max_pool over contiguous per-graph segments: a plain sublane
        # max per graph (no [N, G] mask, no compare/select broadcasts).
        rows = []
        for start, count in segments:
            if count == 0:             # defined output for empty graphs
                rows.append(jnp.zeros((1, dim_target), f32))
            else:
                rows.append(jnp.max(z[start:start + count, :],
                                    axis=0, keepdims=True))
        return rows

    # ---- layer 0: first_h = Linear->BN->GELU ; linears[0] = Linear->GELU ----
    w_off, din, dout, s_row, v_off, t_row = blocks[0]
    h = gelu(affine(x_ref[...], w_off, din, dout, s_row))
    z = gelu(affine(h.astype(bf16), v_off, dout, dim_target, t_row))
    z_sum = z
    pooled = pool_max(z)

    # ---- layers 1..: GINConv(nn = Linear->BN) ; linears[l] = plain Linear ---
    for w_off, din, dout, s_row, v_off, t_row in blocks[1:]:
        agg = jnp.dot(adj, h.astype(bf16), preferred_element_type=f32)
        if eps_gin == 0.0:             # trace-time: skip the (1+eps) multiply
            agg = agg + h
        else:
            agg = agg + (1.0 + eps_gin) * h
        h = affine(agg.astype(bf16), w_off, din, dout, s_row)
        z = affine(h.astype(bf16), v_off, dout, dim_target, t_row)
        z_sum = z_sum + z
        pooled = [acc + p for acc, p in zip(pooled, pool_max(z))]

    out_ref[...] = jnp.concatenate(pooled, axis=0)        # one [G, T] store
    nz_ref[...] = jnp.concatenate([z_sum, h], axis=1)     # one [N, T+D] store


# --------------------------- parameters & packing -----------------------------

def _round_up(v, m):
    return ((v + m - 1) // m) * m


def init_params(key, dim_features, dim_target, layers=(16, 16, 8)):
    def linear_init(k, din, dout):
        kw, kb = jax.random.split(k)
        bound = 1.0 / np.sqrt(din)
        w = jax.random.uniform(kw, (din, dout), jnp.float32, -bound, bound)
        b = jax.random.uniform(kb, (dout,), jnp.float32, -bound, bound)
        return w, b

    def bn_init(k, d):
        k1, k2, k3, k4 = jax.random.split(k, 4)
        gamma = 1.0 + 0.1 * jax.random.normal(k1, (d,), jnp.float32)
        beta = 0.1 * jax.random.normal(k2, (d,), jnp.float32)
        mean = 0.1 * jax.random.normal(k3, (d,), jnp.float32)
        var = 1.0 + 0.2 * jax.random.uniform(k4, (d,), jnp.float32)
        return gamma, beta, mean, var

    dims_in = [dim_features] + list(layers[:-1])
    keys = jax.random.split(key, 3 * len(layers))
    layer_params = []
    for li, dout in enumerate(layers):
        din = dims_in[li]
        kw, kbn, kl = keys[3 * li], keys[3 * li + 1], keys[3 * li + 2]
        w, b = linear_init(kw, din, dout)                 # first_h / GIN nn Linear
        bn = bn_init(kbn, dout)                           # BatchNorm1d(dout)
        lw, lb = linear_init(kl, dout, dim_target)        # linears[li]
        layer_params.append({"w": w, "b": b, "bn": bn, "lw": lw, "lb": lb})
    return {"layers": layer_params}


def prepare_model(params, dim_features, dim_target):
    """One-time (model-load) prep, outside the per-call hot path:
    fold Linear bias + eval-mode BatchNorm1d into the node-MLP weights, pack
    all 12 parameter tensors into a bf16 weight slab + an f32 shift/bias slab,
    and build the static row-offset table the kernel uses to slice them."""
    blocks, w_parts, s_parts = [], [], []
    row, din = 0, dim_features
    col_w = dim_target
    for p in params["layers"]:
        w = np.asarray(p["w"], np.float32)
        b = np.asarray(p["b"], np.float32)
        gamma, beta, mean, var = (np.asarray(a, np.float32) for a in p["bn"])
        lw = np.asarray(p["lw"], np.float32)
        lb = np.asarray(p["lb"], np.float32)
        dout = w.shape[1]
        col_w = max(col_w, dout)

        scale = gamma / np.sqrt(var + _BN_EPS)
        w_folded = w * scale[None, :]
        shift = (b - mean) * scale + beta

        w_off = row
        w_parts.append((w_off, w_folded))
        row = _round_up(row + din, 16)        # bf16 sublane-aligned offsets
        v_off = row
        w_parts.append((v_off, lw))
        row = _round_up(row + dout, 16)

        s_row = 2 * len(blocks)
        t_row = s_row + 1
        s_parts.append((s_row, shift))
        s_parts.append((t_row, lb))

        blocks.append((w_off, din, dout, s_row, v_off, t_row))
        din = dout

    w_slab = np.zeros((_round_up(row, 16), col_w), np.float32)
    for off, arr in w_parts:
        w_slab[off:off + arr.shape[0], :arr.shape[1]] = arr

    s_slab = np.zeros((_round_up(2 * len(blocks), 8), col_w), np.float32)
    for r, vec in s_parts:
        s_slab[r, :vec.shape[0]] = vec

    return (jnp.asarray(w_slab).astype(jnp.bfloat16),
            jnp.asarray(s_slab, dtype=jnp.float32),
            tuple(blocks))


def batch_to_segments(batch, num_graphs):
    """Static (start, count) contiguous node range per graph (nodes sorted by graph)."""
    batch = np.asarray(batch)
    segs = []
    for g in range(num_graphs):
        idx = np.nonzero(batch == g)[0]
        if idx.size == 0:
            segs.append((0, 0))
        else:
            # TODO(synk): non-contiguous batch ordering would need a mask/gather path.
            assert np.all(np.diff(idx) == 1), "nodes must be sorted by graph id"
            segs.append((int(idx[0]), int(idx.size)))
    return tuple(segs)


# --------------------------------- forward ------------------------------------

def slidegraph_forward_pallas(x_bf16, adj_bf16, w_slab, s_slab, *,
                              blocks, segments, num_graphs, dim_target,
                              eps_gin=0.0):
    """Fused Pallas forward.  x/adj are passed pre-cast to bf16.
    Returns (out [G, T], Z_sum [N, T], x_final [N, layers[-1]])."""
    n = x_bf16.shape[0]
    d_last = blocks[-1][2]

    # Pad node count to a bf16-sublane multiple (16); padded nodes have zero
    # adjacency rows/cols and fall outside every pooling segment, so they
    # never affect real outputs (and are sliced off the slab below).
    n_pad = (-n) % 16
    if n_pad:
        x_bf16 = jnp.pad(x_bf16, ((0, n_pad), (0, 0)))
        adj_bf16 = jnp.pad(adj_bf16, ((0, n_pad), (0, n_pad)))
    n_full = n + n_pad

    kernel = functools.partial(
        _slidegraph_fused_kernel, blocks=blocks, segments=segments,
        dim_target=dim_target, eps_gin=eps_gin)

    # Advisory cost model so XLA schedules the tiny custom call tightly.
    flops, transcendentals = 0, 0
    for li, (_, din, dout, _, _, _) in enumerate(blocks):
        if li > 0:
            flops += 2 * n_full * n_full * din          # adj @ h aggregation
        flops += 2 * n_full * din * dout                # node MLP
        flops += 2 * n_full * dout * dim_target         # classifier
        if li == 0:
            transcendentals += n_full * (dout + dim_target)   # erf GELUs
    bytes_accessed = (x_bf16.size * 2 + adj_bf16.size * 2 + w_slab.size * 2 +
                      s_slab.size * 4 + num_graphs * dim_target * 4 +
                      n_full * (dim_target + d_last) * 4)

    vmem = pl.BlockSpec(memory_space=pltpu.MemorySpace.VMEM)
    out, nz = pl.pallas_call(
        kernel,
        out_shape=(
            jax.ShapeDtypeStruct((num_graphs, dim_target), jnp.float32),
            jax.ShapeDtypeStruct((n_full, dim_target + d_last), jnp.float32),
        ),
        in_specs=[vmem, vmem, vmem, vmem],
        out_specs=(vmem, vmem),
        cost_estimate=pl.CostEstimate(flops=flops,
                                      transcendentals=transcendentals,
                                      bytes_accessed=bytes_accessed),
        compiler_params=pltpu.CompilerParams(),   # grid-less: defaults
    )(x_bf16, adj_bf16, w_slab, s_slab)

    z_sum = nz[:n, :dim_target]
    x_fin = nz[:n, dim_target:]
    return out, z_sum, x_fin


# --------------------------- pure-JAX reference -------------------------------

def _gelu(v):
    return 0.5 * v * (1.0 + jax.scipy.special.erf(v * _INV_SQRT2))


def _bn_eval(v, gamma, beta, mean, var, eps=_BN_EPS):
    return (v - mean) / jnp.sqrt(var + eps) * gamma + beta


def slidegraph_forward_reference(x, adj, maskT, params, eps_gin=0.0):
    """Pure-JAX reference mirroring the PyTorch module structure (eval mode).

    Matmul operands are cast to bf16 with f32 accumulation to match the
    kernel's deliberate eval-mode MXU precision; bias, BN, GELU and pooling
    stay in f32 and are applied un-fused exactly as in the PyTorch module.
    """
    bf16, f32 = jnp.bfloat16, jnp.float32
    adj_bf = adj.astype(bf16)

    def dot(a, b):
        return jnp.dot(a.astype(bf16), b.astype(bf16), preferred_element_type=f32)

    def pool_max(z):
        rows = []
        for g in range(maskT.shape[1]):
            m = maskT[:, g:g + 1] > 0.5
            rows.append(jnp.max(jnp.where(m, z, f32(_NEG_BIG)), axis=0))
        return jnp.stack(rows, axis=0)

    out, z_sum = None, None
    h = x.astype(f32)
    for li, p in enumerate(params["layers"]):
        gamma, beta, mean, var = p["bn"]
        if li == 0:
            h = _gelu(_bn_eval(dot(h, p["w"]) + p["b"], gamma, beta, mean, var))
            z = _gelu(dot(h, p["lw"]) + p["lb"])
        else:
            agg = (jnp.dot(adj_bf, h.astype(bf16), preferred_element_type=f32)
                   + (1.0 + eps_gin) * h)
            h = _bn_eval(dot(agg, p["w"]) + p["b"], gamma, beta, mean, var)
            z = dot(h, p["lw"]) + p["lb"]
        pooled = pool_max(z)
        z_sum = z if z_sum is None else z_sum + z
        out = pooled if out is None else out + pooled
    return out, z_sum, h


# --------------------------------- main ----------------------------------------

if __name__ == "__main__":
    N_PER_GRAPH = 16
    NUM_GRAPHS = 2
    N = N_PER_GRAPH * NUM_GRAPHS          # 32 nodes
    DIM_FEATURES = 16
    DIM_TARGET = 4
    LAYERS = (16, 16, 8)

    key = jax.random.PRNGKey(0)
    kx, kp = jax.random.split(key)

    # data.x : [N, dim_features] node features
    x = jax.random.normal(kx, (N, DIM_FEATURES), jnp.float32)

    # data.edge_index : [2, E] — bidirectional ring inside each graph
    srcs, dsts = [], []
    for g in range(NUM_GRAPHS):
        base = g * N_PER_GRAPH
        for i in range(N_PER_GRAPH):
            a = base + i
            b = base + (i + 1) % N_PER_GRAPH
            srcs += [a, b]
            dsts += [b, a]
    edge_index = np.array([srcs, dsts], dtype=np.int32)               # [2, 64]

    # data.batch : [N] graph id per node (sorted by graph)
    batch = np.repeat(np.arange(NUM_GRAPHS, dtype=np.int32), N_PER_GRAPH)

    # Dense scatter operand built once in glue JAX (not the hot path).
    adj = jnp.zeros((N, N), jnp.float32).at[edge_index[1], edge_index[0]].add(1.0)
    maskT = jax.nn.one_hot(jnp.asarray(batch), NUM_GRAPHS, dtype=jnp.float32)

    params = init_params(kp, DIM_FEATURES, DIM_TARGET, LAYERS)

    # One-time model prep (BN fold, packing, bf16 casts, segment table).
    w_slab, s_slab, blocks = prepare_model(params, DIM_FEATURES, DIM_TARGET)
    segments = batch_to_segments(batch, NUM_GRAPHS)
    x_bf16 = x.astype(jnp.bfloat16)
    adj_bf16 = adj.astype(jnp.bfloat16)

    fwd = jax.jit(functools.partial(
        slidegraph_forward_pallas, blocks=blocks, segments=segments,
        num_graphs=NUM_GRAPHS, dim_target=DIM_TARGET, eps_gin=0.0))
    out, z_sum, x_last = fwd(x_bf16, adj_bf16, w_slab, s_slab)
    jax.block_until_ready((out, z_sum, x_last))

    assert out.shape == (NUM_GRAPHS, DIM_TARGET)
    assert z_sum.shape == (N, DIM_TARGET)
    assert x_last.shape == (N, LAYERS[-1])

    ref_out, ref_z, ref_x = slidegraph_forward_reference(x, adj, maskT, params)
    # Tolerance covers only the bf16 rounding difference between the kernel's
    # folded weight bf16(w * bn_scale) and the reference's unfolded
    # bf16(w) -> BN-in-f32 path (observed ~1e-3, conservative bound).
    np.testing.assert_allclose(np.asarray(out), np.asarray(ref_out), rtol=3e-2, atol=3e-2)
    np.testing.assert_allclose(np.asarray(z_sum), np.asarray(ref_z), rtol=3e-2, atol=3e-2)
    np.testing.assert_allclose(np.asarray(x_last), np.asarray(ref_x), rtol=3e-2, atol=3e-2)

    print("KERNEL_OK")
</pallas_src>

<mosaic_0001>
module attributes {stable_mosaic.version = 11 : i64} {
  func.func @_slidegraph_fused_kernel(%arg0: memref<32x16xbf16, #tpu.memory_space<vmem>>, %arg1: memref<32x32xbf16, #tpu.memory_space<vmem>>, %arg2: memref<96x16xbf16, #tpu.memory_space<vmem>>, %arg3: memref<8x16xf32, #tpu.memory_space<vmem>>, %arg4: memref<2x4xf32, #tpu.memory_space<vmem>>, %arg5: memref<32x12xf32, #tpu.memory_space<vmem>>) attributes {dimension_semantics = [], scalar_prefetch = 0 : i64, scratch_operands = 0 : i64, tpu.core_type = #tpu.core_type<tc>} {
    %c0 = arith.constant 0 : index
    %c0_0 = arith.constant 0 : index
    %0 = vector.load %arg1[%c0, %c0_0] : memref<32x32xbf16, #tpu.memory_space<vmem>>, vector<32x32xbf16>
    %c0_1 = arith.constant 0 : index
    %c0_2 = arith.constant 0 : index
    %1 = vector.load %arg0[%c0_1, %c0_2] : memref<32x16xbf16, #tpu.memory_space<vmem>>, vector<32x16xbf16>
    %c0_3 = arith.constant 0 : index
    %c0_4 = arith.constant 0 : index
    %2 = vector.load %arg2[%c0_3, %c0_4] : memref<96x16xbf16, #tpu.memory_space<vmem>>, vector<16x16xbf16>
    %c0_5 = arith.constant 0 : index
    %c0_6 = arith.constant 0 : index
    %3 = vector.load %arg3[%c0_5, %c0_6] : memref<8x16xf32, #tpu.memory_space<vmem>>, vector<1x16xf32>
    %cst = arith.constant dense<0.000000e+00> : vector<32x16xf32>
    %4 = tpu.matmul %1, %2, %cst {dimension_numbers = #tpu.dot_dimension_numbers<[1], [0], [0], [1], [0, 0, 1, 1], [], []>} : vector<32x16xbf16>, vector<16x16xbf16>, vector<32x16xf32> -> vector<32x16xf32>
    %5 = vector.broadcast %3 : vector<1x16xf32> to vector<32x16xf32>
    %6 = arith.addf %4, %5 : vector<32x16xf32>
    %cst_7 = arith.constant 5.000000e-01 : f32
    %7 = vector.broadcast %cst_7 : f32 to vector<32x16xf32>
    %8 = arith.mulf %7, %6 : vector<32x16xf32>
    %cst_8 = arith.constant 0.707106769 : f32
    %9 = vector.broadcast %cst_8 : f32 to vector<32x16xf32>
    %10 = arith.mulf %6, %9 : vector<32x16xf32>
    %11 = math.erf %10 : vector<32x16xf32>
    %cst_9 = arith.constant 1.000000e+00 : f32
    %12 = vector.broadcast %cst_9 : f32 to vector<32x16xf32>
    %13 = arith.addf %12, %11 : vector<32x16xf32>
    %14 = arith.mulf %8, %13 : vector<32x16xf32>
    %15 = arith.truncf %14 : vector<32x16xf32> to vector<32x16xbf16>
    %c16 = arith.constant 16 : index
    %c0_10 = arith.constant 0 : index
    %16 = vector.load %arg2[%c16, %c0_10] : memref<96x16xbf16, #tpu.memory_space<vmem>>, vector<16x4xbf16>
    %c1 = arith.constant 1 : index
    %c0_11 = arith.constant 0 : index
    %17 = vector.load %arg3[%c1, %c0_11] : memref<8x16xf32, #tpu.memory_space<vmem>>, vector<1x4xf32>
    %cst_12 = arith.constant dense<0.000000e+00> : vector<32x4xf32>
    %18 = tpu.matmul %15, %16, %cst_12 {dimension_numbers = #tpu.dot_dimension_numbers<[1], [0], [0], [1], [0, 0, 1, 1], [], []>} : vector<32x16xbf16>, vector<16x4xbf16>, vector<32x4xf32> -> vector<32x4xf32>
    %19 = vector.broadcast %17 : vector<1x4xf32> to vector<32x4xf32>
    %20 = arith.addf %18, %19 : vector<32x4xf32>
    %cst_13 = arith.constant 5.000000e-01 : f32
    %21 = vector.broadcast %cst_13 : f32 to vector<32x4xf32>
    %22 = arith.mulf %21, %20 : vector<32x4xf32>
    %cst_14 = arith.constant 0.707106769 : f32
    %23 = vector.broadcast %cst_14 : f32 to vector<32x4xf32>
    %24 = arith.mulf %20, %23 : vector<32x4xf32>
    %25 = math.erf %24 : vector<32x4xf32>
    %cst_15 = arith.constant 1.000000e+00 : f32
    %26 = vector.broadcast %cst_15 : f32 to vector<32x4xf32>
    %27 = arith.addf %26, %25 : vector<32x4xf32>
    %28 = arith.mulf %22, %27 : vector<32x4xf32>
    %29 = vector.extract_strided_slice %28 {offsets = [0, 0], sizes = [16, 4], strides = [1, 1]} : vector<32x4xf32> to vector<16x4xf32>
    %cst_16 = arith.constant dense<0xFF800000> : vector<4xf32>
    %30 = vector.multi_reduction <maximumf>, %29, %cst_16 [0] : vector<16x4xf32> to vector<4xf32>
    %31 = vector.shape_cast %30 : vector<4xf32> to vector<1x4xf32>
    %32 = vector.extract_strided_slice %28 {offsets = [16, 0], sizes = [16, 4], strides = [1, 1]} : vector<32x4xf32> to vector<16x4xf32>
    %cst_17 = arith.constant dense<0xFF800000> : vector<4xf32>
    %33 = vector.multi_reduction <maximumf>, %32, %cst_17 [0] : vector<16x4xf32> to vector<4xf32>
    %34 = vector.shape_cast %33 : vector<4xf32> to vector<1x4xf32>
    %35 = arith.truncf %14 : vector<32x16xf32> to vector<32x16xbf16>
    %cst_18 = arith.constant dense<0.000000e+00> : vector<32x16xf32>
    %36 = tpu.matmul %0, %35, %cst_18 {dimension_numbers = #tpu.dot_dimension_numbers<[1], [0], [0], [1], [0, 0, 1, 1], [], []>} : vector<32x32xbf16>, vector<32x16xbf16>, vector<32x16xf32> -> vector<32x16xf32>
    %37 = arith.addf %36, %14 : vector<32x16xf32>
    %38 = arith.truncf %37 : vector<32x16xf32> to vector<32x16xbf16>
    %c32 = arith.constant 32 : index
    %c0_19 = arith.constant 0 : index
    %39 = vector.load %arg2[%c32, %c0_19] : memref<96x16xbf16, #tpu.memory_space<vmem>>, vector<16x16xbf16>
    %c2 = arith.constant 2 : index
    %c0_20 = arith.constant 0 : index
    %40 = vector.load %arg3[%c2, %c0_20] : memref<8x16xf32, #tpu.memory_space<vmem>>, vector<1x16xf32>
    %cst_21 = arith.constant dense<0.000000e+00> : vector<32x16xf32>
    %41 = tpu.matmul %38, %39, %cst_21 {dimension_numbers = #tpu.dot_dimension_numbers<[1], [0], [0], [1], [0, 0, 1, 1], [], []>} : vector<32x16xbf16>, vector<16x16xbf16>, vector<32x16xf32> -> vector<32x16xf32>
    %42 = vector.broadcast %40 : vector<1x16xf32> to vector<32x16xf32>
    %43 = arith.addf %41, %42 : vector<32x16xf32>
    %44 = arith.truncf %43 : vector<32x16xf32> to vector<32x16xbf16>
    %c48 = arith.constant 48 : index
    %c0_22 = arith.constant 0 : index
    %45 = vector.load %arg2[%c48, %c0_22] : memref<96x16xbf16, #tpu.memory_space<vmem>>, vector<16x4xbf16>
    %c3 = arith.constant 3 : index
    %c0_23 = arith.constant 0 : index
    %46 = vector.load %arg3[%c3, %c0_23] : memref<8x16xf32, #tpu.memory_space<vmem>>, vector<1x4xf32>
    %cst_24 = arith.constant dense<0.000000e+00> : vector<32x4xf32>
    %47 = tpu.matmul %44, %45, %cst_24 {dimension_numbers = #tpu.dot_dimension_numbers<[1], [0], [0], [1], [0, 0, 1, 1], [], []>} : vector<32x16xbf16>, vector<16x4xbf16>, vector<32x4xf32> -> vector<32x4xf32>
    %48 = vector.broadcast %46 : vector<1x4xf32> to vector<32x4xf32>
    %49 = arith.addf %47, %48 : vector<32x4xf32>
    %50 = arith.addf %28, %49 : vector<32x4xf32>
    %51 = vector.extract_strided_slice %49 {offsets = [0, 0], sizes = [16, 4], strides = [1, 1]} : vector<32x4xf32> to vector<16x4xf32>
    %cst_25 = arith.constant dense<0xFF800000> : vector<4xf32>
    %52 = vector.multi_reduction <maximumf>, %51, %cst_25 [0] : vector<16x4xf32> to vector<4xf32>
    %53 = vector.shape_cast %52 : vector<4xf32> to vector<1x4xf32>
    %54 = vector.extract_strided_slice %49 {offsets = [16, 0], sizes = [16, 4], strides = [1, 1]} : vector<32x4xf32> to vector<16x4xf32>
    %cst_26 = arith.constant dense<0xFF800000> : vector<4xf32>
    %55 = vector.multi_reduction <maximumf>, %54, %cst_26 [0] : vector<16x4xf32> to vector<4xf32>
    %56 = vector.shape_cast %55 : vector<4xf32> to vector<1x4xf32>
    %57 = arith.addf %31, %53 : vector<1x4xf32>
    %58 = arith.addf %34, %56 : vector<1x4xf32>
    %59 = arith.truncf %43 : vector<32x16xf32> to vector<32x16xbf16>
    %cst_27 = arith.constant dense<0.000000e+00> : vector<32x16xf32>
    %60 = tpu.matmul %0, %59, %cst_27 {dimension_numbers = #tpu.dot_dimension_numbers<[1], [0], [0], [1], [0, 0, 1, 1], [], []>} : vector<32x32xbf16>, vector<32x16xbf16>, vector<32x16xf32> -> vector<32x16xf32>
    %61 = arith.addf %60, %43 : vector<32x16xf32>
    %62 = arith.truncf %61 : vector<32x16xf32> to vector<32x16xbf16>
    %c64 = arith.constant 64 : index
    %c0_28 = arith.constant 0 : index
    %63 = vector.load %arg2[%c64, %c0_28] : memref<96x16xbf16, #tpu.memory_space<vmem>>, vector<16x8xbf16>
    %c4 = arith.constant 4 : index
    %c0_29 = arith.constant 0 : index
    %64 = vector.load %arg3[%c4, %c0_29] : memref<8x16xf32, #tpu.memory_space<vmem>>, vector<1x8xf32>
    %cst_30 = arith.constant dense<0.000000e+00> : vector<32x8xf32>
    %65 = tpu.matmul %62, %63, %cst_30 {dimension_numbers = #tpu.dot_dimension_numbers<[1], [0], [0], [1], [0, 0, 1, 1], [], []>} : vector<32x16xbf16>, vector<16x8xbf16>, vector<32x8xf32> -> vector<32x8xf32>
    %66 = vector.broadcast %64 : vector<1x8xf32> to vector<32x8xf32>
    %67 = arith.addf %65, %66 : vector<32x8xf32>
    %68 = arith.truncf %67 : vector<32x8xf32> to vector<32x8xbf16>
    %c80 = arith.constant 80 : index
    %c0_31 = arith.constant 0 : index
    %69 = vector.load %arg2[%c80, %c0_31] : memref<96x16xbf16, #tpu.memory_space<vmem>>, vector<8x4xbf16>
    %c5 = arith.constant 5 : index
    %c0_32 = arith.constant 0 : index
    %70 = vector.load %arg3[%c5, %c0_32] : memref<8x16xf32, #tpu.memory_space<vmem>>, vector<1x4xf32>
    %cst_33 = arith.constant dense<0.000000e+00> : vector<32x4xf32>
    %71 = tpu.matmul %68, %69, %cst_33 {dimension_numbers = #tpu.dot_dimension_numbers<[1], [0], [0], [1], [0, 0, 1, 1], [], []>} : vector<32x8xbf16>, vector<8x4xbf16>, vector<32x4xf32> -> vector<32x4xf32>
    %72 = vector.broadcast %70 : vector<1x4xf32> to vector<32x4xf32>
    %73 = arith.addf %71, %72 : vector<32x4xf32>
    %74 = arith.addf %50, %73 : vector<32x4xf32>
    %75 = vector.extract_strided_slice %73 {offsets = [0, 0], sizes = [16, 4], strides = [1, 1]} : vector<32x4xf32> to vector<16x4xf32>
    %cst_34 = arith.constant dense<0xFF800000> : vector<4xf32>
    %76 = vector.multi_reduction <maximumf>, %75, %cst_34 [0] : vector<16x4xf32> to vector<4xf32>
    %77 = vector.shape_cast %76 : vector<4xf32> to vector<1x4xf32>
    %78 = vector.extract_strided_slice %73 {offsets = [16, 0], sizes = [16, 4], strides = [1, 1]} : vector<32x4xf32> to vector<16x4xf32>
    %cst_35 = arith.constant dense<0xFF800000> : vector<4xf32>
    %79 = vector.multi_reduction <maximumf>, %78, %cst_35 [0] : vector<16x4xf32> to vector<4xf32>
    %80 = vector.shape_cast %79 : vector<4xf32> to vector<1x4xf32>
    %81 = arith.addf %57, %77 : vector<1x4xf32>
    %82 = arith.addf %58, %80 : vector<1x4xf32>
    %83 = tpu.concatenate %81, %82 in 0 : vector<1x4xf32>, vector<1x4xf32> -> vector<2x4xf32>
    %c0_36 = arith.constant 0 : index
    %c0_37 = arith.constant 0 : index
    %84 = vector.load %arg4[%c0_36, %c0_37] : memref<2x4xf32, #tpu.memory_space<vmem>>, vector<2x4xf32>
    tpu.vector_store %arg4[%c0_36, %c0_37], %83 {strides = array<i32>} : memref<2x4xf32, #tpu.memory_space<vmem>>, vector<2x4xf32>,
    %85 = tpu.concatenate %74, %67 in 1 : vector<32x4xf32>, vector<32x8xf32> -> vector<32x12xf32>
    %c0_38 = arith.constant 0 : index
    %c0_39 = arith.constant 0 : index
    %86 = vector.load %arg5[%c0_38, %c0_39] : memref<32x12xf32, #tpu.memory_space<vmem>>, vector<32x12xf32>
    tpu.vector_store %arg5[%c0_38, %c0_39], %85 {strides = array<i32>} : memref<32x12xf32, #tpu.memory_space<vmem>>, vector<32x12xf32>,
    return
  }
}

</mosaic_0001>

<llo_original>
// kernel: slidegraph_forward_pallas.1
$region0: #{slidegraph_forward_pallas.1}
  #allocation0 [shape = 'u32[]', space=smem, size = 0x4, offset = 0x4, fixed_abs, tag = 'smem constant byte address 0x4 - core index']
  #allocation1 [shape = 'u32[144,128]{1,0:T(1,128)}', space=vmem, size = 0x12000, scoped, tag = 'internal scratch']
  %s0 = inlined_call_operand.vmem [shape: bf16[32,16], index: 0, kind: input, shape index: {}]
  %s1 = inlined_call_operand.vmem [shape: bf16[32,32], index: 1, kind: input, shape index: {}]
  %s2 = inlined_call_operand.vmem [shape: bf16[96,16], index: 2, kind: input, shape index: {}]
  %s3 = inlined_call_operand.vmem [shape: f32[8,16], index: 3, kind: input, shape index: {}]
  %s4 = inlined_call_operand.hbm [shape: f32[2,4], index: 4, kind: output, shape index: {0}]
  %s5 = inlined_call_operand.vmem [shape: f32[32,12], index: 5, kind: output, shape index: {1}]
  %6 = xla_tuple %s4, %s5
  %s7 = sld [smem:[#allocation0]]
  $region34: #{slidegraph_forward_pallas.1} parent=0
    _
  %s9 = ssub.s32 1, %s7
  %s10 = scalar_select 0, %s9, %s7
  $region1: #{slidegraph_forward_pallas.1} parent=0
    #allocation2 [shape = 'u8[1024]{0}', space=vmem, size = 0x400, scoped, tag = 'output window, operand 0, single buffered']
    #allocation3 [shape = 's32[1]{0}', space=sflag, size = 0x4, scoped, tag = 'scoped memory for slidegraph_forward_pallas.1']
    %11 = vsyncpa [#allocation3], 0
    // Predicated region
    $region2: #{slidegraph_forward_pallas.1} parent=1 // pred_check
      _
    $region3: #{slidegraph_forward_pallas.1} parent=1 // pred_check_branch
      %13 = sbr.rel (0) target = $region5
    $region4: #{slidegraph_forward_pallas.1} parent=1 // pred_region
      _
    $region5: #{slidegraph_forward_pallas.1} parent=1 // pred_fallthru
      _
    // Predicated region
    $region6: #{slidegraph_forward_pallas.1} parent=1 // pred_check
      _
    $region7: #{slidegraph_forward_pallas.1} parent=1 // pred_check_branch
      %15 = sbr.rel (0) target = $region9
    $region8: #{slidegraph_forward_pallas.1} parent=1 // pred_region
      _
    $region9: #{slidegraph_forward_pallas.1} parent=1 // pred_fallthru
      _
    // Predicated region
    $region10: #{slidegraph_forward_pallas.1} parent=1 // pred_check
      _
    $region11: #{slidegraph_forward_pallas.1} parent=1 // pred_check_branch
      %17 = sbr.rel (0) target = $region13
    $region12: #{slidegraph_forward_pallas.1} parent=1 // pred_region
      _
    $region13: #{slidegraph_forward_pallas.1} parent=1 // pred_fallthru
      _
    // Predicated region
    $region14: #{slidegraph_forward_pallas.1} parent=1 // pred_check
      _
    $region15: #{slidegraph_forward_pallas.1} parent=1 // pred_check_branch
      %19 = sbr.rel (0) target = $region17
    $region16: #{slidegraph_forward_pallas.1} parent=1 // pred_region
      _
    $region17: #{slidegraph_forward_pallas.1} parent=1 // pred_fallthru
      _
    %v21 = vld [vmem:[%s1] sm:$0xf]
    %v22 = vld [vmem:[%s1 + $0x4] sm:$0xf]
    %v23 = vld [vmem:[%s1 + $0x8] sm:$0xf]
    %v24 = vld [vmem:[%s1 + $0xc] sm:$0xf]
    %v25 = vld [vmem:[%s0] sm:$0xf]
    %v26 = vld [vmem:[%s0 + $0x4] sm:$0xf]
    %v27 = vld [vmem:[%s0 + $0x8] sm:$0xf]
    %v28 = vld [vmem:[%s0 + $0xc] sm:$0xf]
    %v29 = vld [vmem:[%s2] sm:$0xf]
    %v30 = vld [vmem:[%s2 + $0x4] sm:$0xf]
    %v31 = vld [vmem:[%s3] sm:$0x1]
    %v32 = vlaneseq
    %v33 = vshrl.u32 %v32, 7
    %v34 = vsub.s32 0, %v33
    %v35 = vrot.slane %v31, %v34
    %v40 = vunpack.c.l.b16 %v25
    %v41 = vunpack.c.l.b16 %v26
    %v42 = vunpack.c.l.b16 %v27
    %v43 = vunpack.c.l.b16 %v28
    %v44 = vpack.c.b16 %v41, %v40
    %v45 = vpack.c.b16 %v43, %v42
    %v48 = vunpack.c.l.b16 %v29
    %v49 = vunpack.c.l.b16 %v30
    %v50 = vpack.c.b16 %v49, %v48
    %vm52 = vcmask 130048
    %v54 = vsel %vm52, %v44, 0
    %v57 = vsel %vm52, %v45, 0
    %59 = vmatprep.subr.bf16.mxu0 0
    %60 = vmatpush1.bf16.msra.mxu0 %v50
    %61 = vmatprep.subr.bf16.mxu0 0
    %62 = vmatpush1.bf16.msra.mxu0 0
    %63 = vmatprep.subr.bf16.mxu0 0
    %64 = vmatpush1.bf16.msra.mxu0 0
    %65 = vmatprep.subr.bf16.mxu0 0
    %66 = vmatpush1.bf16.msra.mxu0 0
    %67 = vmatprep.subr.bf16.mxu0 0
    %68 = vmatpush1.bf16.msra.mxu0 0
    %69 = vmatprep.subr.bf16.mxu0 0
    %70 = vmatpush1.bf16.msra.mxu0 0
    %71 = vmatprep.subr.bf16.mxu0 0
    %72 = vmatpush1.bf16.msra.mxu0 0
    %73 = vmatprep.subr.bf16.mxu0 0
    %74 = vmatpush1.bf16.msra.mxu0 0
    %75 = vmatprep.subr.bf16.mxu0 0
    %76 = vmatpush1.bf16.msra.mxu0 0
    %77 = vmatprep.subr.bf16.mxu0 0
    %78 = vmatpush1.bf16.msra.mxu0 0
    %79 = vmatprep.subr.bf16.mxu0 0
    %80 = vmatpush1.bf16.msra.mxu0 0
    %81 = vmatprep.subr.bf16.mxu0 0
    %82 = vmatpush1.bf16.msra.mxu0 0
    %83 = vmatprep.subr.bf16.mxu0 0
    %84 = vmatpush1.bf16.msra.mxu0 0
    %85 = vmatprep.subr.bf16.mxu0 0
    %86 = vmatpush1.bf16.msra.mxu0 0
    %87 = vmatprep.subr.bf16.mxu0 0
    %88 = vmatpush1.bf16.msra.mxu0 0
    %89 = vmatprep.subr.bf16.mxu0 0
    %90 = vmatpush1.bf16.msra.mxu0 0
    %91 = vmatprep.mubr.bf16.mxu0 0
    %92 = vmatmul.mubr.bf16.gmra.mrb[0].mxu0 %v54
    %v93 = vpop.f32.mrb[0].mxu0
    %v94 = vadd.f32 %v35, %v93
    %v95 = vpop.f32.mrb[0].mxu0
    %v96 = vpop.f32.mrb[0].mxu0
    %v97 = vadd.f32 %v35, %v96
    %v98 = vpop.f32.mrb[0].mxu0
    %99 = vmatprep.mubr.bf16.mxu0 0
    %100 = vmatmul.mubr.bf16.gmra.mrb[0].mxu0 %v57
    %v101 = vpop.f32.mrb[0].mxu0
    %v102 = vadd.f32 %v35, %v101
    %v103 = vpop.f32.mrb[0].mxu0
    %v104 = vpop.f32.mrb[0].mxu0
    %v105 = vadd.f32 %v35, %v104
    %v106 = vpop.f32.mrb[0].mxu0
    %107 = vdwg.mxu0
    %v108 = vmul.f32 %v94, 0.5
    %v109 = vmul.f32 %v97, 0.5
    %v110 = vmul.f32 %v102, 0.5
    %v111 = vmul.f32 %v105, 0.5
    %v112 = vmul.f32 %v94, 0.70710677
    %v113 = vmul.f32 %v97, 0.70710677
    %v114 = vmul.f32 %v102, 0.70710677
    %v115 = vmul.f32 %v105, 0.70710677
    %v116 = verf.f32.pop %v112
    %v117 = verf.f32.pop %v113
    %v118 = verf.f32.pop %v114
    %v119 = verf.f32.pop %v115
    %v120 = vadd.f32 %v116, 1.0
    %v121 = vadd.f32 %v117, 1.0
    %v122 = vadd.f32 %v118, 1.0
    %v123 = vadd.f32 %v119, 1.0
    %v124 = vmul.f32 %v108, %v120
    %v125 = vmul.f32 %v109, %v121
    %v126 = vmul.f32 %v110, %v122
    %v127 = vmul.f32 %v111, %v123
    %v128 = vpack.c.bf16 %v125, %v124
    %v129 = vpack.c.bf16 %v127, %v126
    %v130 = vld [vmem:[%s2 + $0x8] sm:$0xf]
    %v131 = vld [vmem:[%s2 + $0xc] sm:$0xf]
    %v132 = vld [vmem:[%s3 + $0x1] sm:$0x1]
    %v133 = vlaneseq
    %v134 = vshrl.u32 %v133, 7
    %v135 = vsub.s32 0, %v134
    %v136 = vrot.slane %v132, %v135
    %v139 = vunpack.c.l.b16 %v130
    %v140 = vunpack.c.l.b16 %v131
    %v141 = vpack.c.b16 %v140, %v139
    %v144 = vsel %vm52, %v128, 0
    %v147 = vsel %vm52, %v129, 0
    %149 = vmatprep.subr.bf16.mxu0 0
    %150 = vmatpush1.bf16.msra.mxu0 %v141
    %151 = vmatprep.subr.bf16.mxu0 0
    %152 = vmatpush1.bf16.msra.mxu0 0
    %153 = vmatprep.subr.bf16.mxu0 0
    %154 = vmatpush1.bf16.msra.mxu0 0
    %155 = vmatprep.subr.bf16.mxu0 0
    %156 = vmatpush1.bf16.msra.mxu0 0
    %157 = vmatprep.subr.bf16.mxu0 0
    %158 = vmatpush1.bf16.msra.mxu0 0
    %159 = vmatprep.subr.bf16.mxu0 0
    %160 = vmatpush1.bf16.msra.mxu0 0
    %161 = vmatprep.subr.bf16.mxu0 0
    %162 = vmatpush1.bf16.msra.mxu0 0
    %163 = vmatprep.subr.bf16.mxu0 0
    %164 = vmatpush1.bf16.msra.mxu0 0
    %165 = vmatprep.subr.bf16.mxu0 0
    %166 = vmatpush1.bf16.msra.mxu0 0
    %167 = vmatprep.subr.bf16.mxu0 0
    %168 = vmatpush1.bf16.msra.mxu0 0
    %169 = vmatprep.subr.bf16.mxu0 0
    %170 = vmatpush1.bf16.msra.mxu0 0
    %171 = vmatprep.subr.bf16.mxu0 0
    %172 = vmatpush1.bf16.msra.mxu0 0
    %173 = vmatprep.subr.bf16.mxu0 0
    %174 = vmatpush1.bf16.msra.mxu0 0
    %175 = vmatprep.subr.bf16.mxu0 0
    %176 = vmatpush1.bf16.msra.mxu0 0
    %177 = vmatprep.subr.bf16.mxu0 0
    %178 = vmatpush1.bf16.msra.mxu0 0
    %179 = vmatprep.subr.bf16.mxu0 0
    %180 = vmatpush1.bf16.msra.mxu0 0
    %181 = vmatprep.mubr.bf16.mxu0 0
    %182 = vmatmul.mubr.bf16.gmra.mrb[0].mxu0 %v144
    %v183 = vpop.f32.mrb[0].mxu0
    %v184 = vadd.f32 %v136, %v183
    %v185 = vpop.f32.mrb[0].mxu0
    %v186 = vpop.f32.mrb[0].mxu0
    %v187 = vadd.f32 %v136, %v186
    %v188 = vpop.f32.mrb[0].mxu0
    %189 = vmatprep.mubr.bf16.mxu0 0
    %190 = vmatmul.mubr.bf16.gmra.mrb[0].mxu0 %v147
    %v191 = vpop.f32.mrb[0].mxu0
    %v192 = vadd.f32 %v136, %v191
    %v193 = vpop.f32.mrb[0].mxu0
    %v194 = vpop.f32.mrb[0].mxu0
    %v195 = vadd.f32 %v136, %v194
    %v196 = vpop.f32.mrb[0].mxu0
    %197 = vdwg.mxu0
    %v198 = vmul.f32 %v184, 0.5
    %v199 = vmul.f32 %v187, 0.5
    %v200 = vmul.f32 %v192, 0.5
    %v201 = vmul.f32 %v195, 0.5
    %v202 = vmul.f32 %v184, 0.70710677
    %v203 = vmul.f32 %v187, 0.70710677
    %v204 = vmul.f32 %v192, 0.70710677
    %v205 = vmul.f32 %v195, 0.70710677
    %v206 = verf.f32.pop %v202
    %v207 = verf.f32.pop %v203
    %v208 = verf.f32.pop %v204
    %v209 = verf.f32.pop %v205
    %v210 = vadd.f32 %v206, 1.0
    %v211 = vadd.f32 %v207, 1.0
    %v212 = vadd.f32 %v208, 1.0
    %v213 = vadd.f32 %v209, 1.0
    %v214 = vmul.f32 %v198, %v210
    %v215 = vmul.f32 %v199, %v211
    %v216 = vmul.f32 %v200, %v212
    %v217 = vmul.f32 %v201, %v213
    %vm218 = vcmask 31744
    %v219 = vsel %vm218, %v214, -inf
    %v220 = vsel %vm218, %v215, -inf
    %v221 = vmax.f32 %v219, %v220
    %v222 = vrot.slane %v221, 4
    %v223 = vmax.f32 %v221, %v222
    %v224 = vrot.slane %v223, 2
    %v225 = vmax.f32 %v223, %v224
    %v226 = vrot.slane %v225, 1
    %v227 = vmax.f32 %v225, %v226
    %v228 = vsel %vm218, %v216, -inf
    %v229 = vsel %vm218, %v217, -inf
    %v230 = vmax.f32 %v228, %v229
    %v231 = vrot.slane %v230, 4
    %v232 = vmax.f32 %v230, %v231
    %v233 = vrot.slane %v232, 2
    %v234 = vmax.f32 %v232, %v233
    %v235 = vrot.slane %v234, 1
    %v236 = vmax.f32 %v234, %v235
    %v241 = vunpack.c.l.b16 %v21
    %v242 = vunpack.c.l.b16 %v22
    %v243 = vunpack.c.l.b16 %v23
    %v244 = vunpack.c.l.b16 %v24
    %v245 = vpack.c.b16 %v242, %v241
    %v246 = vpack.c.b16 %v244, %v243
    %vm247 = vcmask 261120
    %v249 = vsel %vm247, %v245, 0
    %v252 = vsel %vm247, %v246, 0
    %254 = vmatprep.subr.bf16.mxu0 0
    %255 = vmatpush1.bf16.msra.mxu0 %v128
    %256 = vmatprep.subr.bf16.mxu0 0
    %257 = vmatpush1.bf16.msra.mxu0 %v129
    %258 = vmatprep.subr.bf16.mxu0 0
    %259 = vmatpush1.bf16.msra.mxu0 0
    %260 = vmatprep.subr.bf16.mxu0 0
    %261 = vmatpush1.bf16.msra.mxu0 0
    %262 = vmatprep.subr.bf16.mxu0 0
    %263 = vmatpush1.bf16.msra.mxu0 0
    %264 = vmatprep.subr.bf16.mxu0 0
    %265 = vmatpush1.bf16.msra.mxu0 0
    %266 = vmatprep.subr.bf16.mxu0 0
    %267 = vmatpush1.bf16.msra.mxu0 0
    %268 = vmatprep.subr.bf16.mxu0 0
    %269 = vmatpush1.bf16.msra.mxu0 0
    %270 = vmatprep.subr.bf16.mxu0 0
    %271 = vmatpush1.bf16.msra.mxu0 0
    %272 = vmatprep.subr.bf16.mxu0 0
    %273 = vmatpush1.bf16.msra.mxu0 0
    %274 = vmatprep.subr.bf16.mxu0 0
    %275 = vmatpush1.bf16.msra.mxu0 0
    %276 = vmatprep.subr.bf16.mxu0 0
    %277 = vmatpush1.bf16.msra.mxu0 0
    %278 = vmatprep.subr.bf16.mxu0 0
    %279 = vmatpush1.bf16.msra.mxu0 0
    %280 = vmatprep.subr.bf16.mxu0 0
    %281 = vmatpush1.bf16.msra.mxu0 0
    %282 = vmatprep.subr.bf16.mxu0 0
    %283 = vmatpush1.bf16.msra.mxu0 0
    %284 = vmatprep.subr.bf16.mxu0 0
    %285 = vmatpush1.bf16.msra.mxu0 0
    %286 = vmatprep.mubr.bf16.mxu0 0
    %287 = vmatmul.mubr.bf16.gmra.mrb[0].mxu0 %v249
    %v288 = vpop.f32.mrb[0].mxu0
    %v289 = vadd.f32 %v124, %v288
    %v290 = vpop.f32.mrb[0].mxu0
    %v291 = vpop.f32.mrb[0].mxu0
    %v292 = vadd.f32 %v125, %v291
    %v293 = vpop.f32.mrb[0].mxu0
    %294 = vmatprep.mubr.bf16.mxu0 0
    %295 = vmatmul.mubr.bf16.gmra.mrb[0].mxu0 %v252
    %v296 = vpop.f32.mrb[0].mxu0
    %v297 = vadd.f32 %v126, %v296
    %v298 = vpop.f32.mrb[0].mxu0
    %v299 = vpop.f32.mrb[0].mxu0
    %v300 = vadd.f32 %v127, %v299
    %v301 = vpop.f32.mrb[0].mxu0
    %302 = vdwg.mxu0
    %v303 = vpack.c.bf16 %v292, %v289
    %v304 = vpack.c.bf16 %v300, %v297
    %v305 = vld [vmem:[%s2 + $0x10] sm:$0xf]
    %v306 = vld [vmem:[%s2 + $0x14] sm:$0xf]
    %v307 = vld [vmem:[%s3 + $0x2] sm:$0x1]
    %v308 = vlaneseq
    %v309 = vshrl.u32 %v308, 7
    %v310 = vsub.s32 0, %v309
    %v311 = vrot.slane %v307, %v310
    %v314 = vunpack.c.l.b16 %v305
    %v315 = vunpack.c.l.b16 %v306
    %v316 = vpack.c.b16 %v315, %v314
    %v319 = vsel %vm52, %v303, 0
    %v322 = vsel %vm52, %v304, 0
    %324 = vmatprep.subr.bf16.mxu0 0
    %325 = vmatpush1.bf16.msra.mxu0 %v316
    %326 = vmatprep.subr.bf16.mxu0 0
    %327 = vmatpush1.bf16.msra.mxu0 0
    %328 = vmatprep.subr.bf16.mxu0 0
    %329 = vmatpush1.bf16.msra.mxu0 0
    %330 = vmatprep.subr.bf16.mxu0 0
    %331 = vmatpush1.bf16.msra.mxu0 0
    %332 = vmatprep.subr.bf16.mxu0 0
    %333 = vmatpush1.bf16.msra.mxu0 0
    %334 = vmatprep.subr.bf16.mxu0 0
    %335 = vmatpush1.bf16.msra.mxu0 0
    %336 = vmatprep.subr.bf16.mxu0 0
    %337 = vmatpush1.bf16.msra.mxu0 0
    %338 = vmatprep.subr.bf16.mxu0 0
    %339 = vmatpush1.bf16.msra.mxu0 0
    %340 = vmatprep.subr.bf16.mxu0 0
    %341 = vmatpush1.bf16.msra.mxu0 0
    %342 = vmatprep.subr.bf16.mxu0 0
    %343 = vmatpush1.bf16.msra.mxu0 0
    %344 = vmatprep.subr.bf16.mxu0 0
    %345 = vmatpush1.bf16.msra.mxu0 0
    %346 = vmatprep.subr.bf16.mxu0 0
    %347 = vmatpush1.bf16.msra.mxu0 0
    %348 = vmatprep.subr.bf16.mxu0 0
    %349 = vmatpush1.bf16.msra.mxu0 0
    %350 = vmatprep.subr.bf16.mxu0 0
    %351 = vmatpush1.bf16.msra.mxu0 0
    %352 = vmatprep.subr.bf16.mxu0 0
    %353 = vmatpush1.bf16.msra.mxu0 0
    %354 = vmatprep.subr.bf16.mxu0 0
    %355 = vmatpush1.bf16.msra.mxu0 0
    %356 = vmatprep.mubr.bf16.mxu0 0
    %357 = vmatmul.mubr.bf16.gmra.mrb[0].mxu0 %v319
    %v358 = vpop.f32.mrb[0].mxu0
    %v359 = vadd.f32 %v311, %v358
    %v360 = vpop.f32.mrb[0].mxu0
    %v361 = vpop.f32.mrb[0].mxu0
    %v362 = vadd.f32 %v311, %v361
    %v363 = vpop.f32.mrb[0].mxu0
    %364 = vmatprep.mubr.bf16.mxu0 0
    %365 = vmatmul.mubr.bf16.gmra.mrb[0].mxu0 %v322
    %v366 = vpop.f32.mrb[0].mxu0
    %v367 = vadd.f32 %v311, %v366
    %v368 = vpop.f32.mrb[0].mxu0
    %v369 = vpop.f32.mrb[0].mxu0
    %v370 = vadd.f32 %v311, %v369
    %v371 = vpop.f32.mrb[0].mxu0
    %372 = vdwg.mxu0
    %v373 = vpack.c.bf16 %v362, %v359
    %v374 = vpack.c.bf16 %v370, %v367
    %v375 = vld [vmem:[%s2 + $0x18] sm:$0xf]
    %v376 = vld [vmem:[%s2 + $0x1c] sm:$0xf]
    %v377 = vld [vmem:[%s3 + $0x3] sm:$0x1]
    %v378 = vlaneseq
    %v379 = vshrl.u32 %v378, 7
    %v380 = vsub.s32 0, %v379
    %v381 = vrot.slane %v377, %v380
    %v384 = vunpack.c.l.b16 %v375
    %v385 = vunpack.c.l.b16 %v376
    %v386 = vpack.c.b16 %v385, %v384
    %v389 = vsel %vm52, %v373, 0
    %v392 = vsel %vm52, %v374, 0
    %394 = vmatprep.subr.bf16.mxu0 0
    %395 = vmatpush1.bf16.msra.mxu0 %v386
    %396 = vmatprep.subr.bf16.mxu0 0
    %397 = vmatpush1.bf16.msra.mxu0 0
    %398 = vmatprep.subr.bf16.mxu0 0
    %399 = vmatpush1.bf16.msra.mxu0 0
    %400 = vmatprep.subr.bf16.mxu0 0
    %401 = vmatpush1.bf16.msra.mxu0 0
    %402 = vmatprep.subr.bf16.mxu0 0
    %403 = vmatpush1.bf16.msra.mxu0 0
    %404 = vmatprep.subr.bf16.mxu0 0
    %405 = vmatpush1.bf16.msra.mxu0 0
    %406 = vmatprep.subr.bf16.mxu0 0
    %407 = vmatpush1.bf16.msra.mxu0 0
    %408 = vmatprep.subr.bf16.mxu0 0
    %409 = vmatpush1.bf16.msra.mxu0 0
    %410 = vmatprep.subr.bf16.mxu0 0
    %411 = vmatpush1.bf16.msra.mxu0 0
    %412 = vmatprep.subr.bf16.mxu0 0
    %413 = vmatpush1.bf16.msra.mxu0 0
    %414 = vmatprep.subr.bf16.mxu0 0
    %415 = vmatpush1.bf16.msra.mxu0 0
    %416 = vmatprep.subr.bf16.mxu0 0
    %417 = vmatpush1.bf16.msra.mxu0 0
    %418 = vmatprep.subr.bf16.mxu0 0
    %419 = vmatpush1.bf16.msra.mxu0 0
    %420 = vmatprep.subr.bf16.mxu0 0
    %421 = vmatpush1.bf16.msra.mxu0 0
    %422 = vmatprep.subr.bf16.mxu0 0
    %423 = vmatpush1.bf16.msra.mxu0 0
    %424 = vmatprep.subr.bf16.mxu0 0
    %425 = vmatpush1.bf16.msra.mxu0 0
    %426 = vmatprep.mubr.bf16.mxu0 0
    %427 = vmatmul.mubr.bf16.gmra.mrb[0].mxu0 %v389
    %v428 = vpop.f32.mrb[0].mxu0
    %v429 = vadd.f32 %v381, %v428
    %v430 = vpop.f32.mrb[0].mxu0
    %v431 = vpop.f32.mrb[0].mxu0
    %v432 = vadd.f32 %v381, %v431
    %v433 = vpop.f32.mrb[0].mxu0
    %434 = vmatprep.mubr.bf16.mxu0 0
    %435 = vmatmul.mubr.bf16.gmra.mrb[0].mxu0 %v392
    %v436 = vpop.f32.mrb[0].mxu0
    %v437 = vadd.f32 %v381, %v436
    %v438 = vpop.f32.mrb[0].mxu0
    %v439 = vpop.f32.mrb[0].mxu0
    %v440 = vadd.f32 %v381, %v439
    %v441 = vpop.f32.mrb[0].mxu0
    %442 = vdwg.mxu0
    %v443 = vadd.f32 %v214, %v429
    %v444 = vadd.f32 %v215, %v432
    %v445 = vadd.f32 %v216, %v437
    %v446 = vadd.f32 %v217, %v440
    %v447 = vsel %vm218, %v429, -inf
    %v448 = vsel %vm218, %v432, -inf
    %v449 = vmax.f32 %v447, %v448
    %v450 = vrot.slane %v449, 4
    %v451 = vmax.f32 %v449, %v450
    %v452 = vrot.slane %v451, 2
    %v453 = vmax.f32 %v451, %v452
    %v454 = vrot.slane %v453, 1
    %v455 = vmax.f32 %v453, %v454
    %v456 = vsel %vm218, %v437, -inf
    %v457 = vsel %vm218, %v440, -inf
    %v458 = vmax.f32 %v456, %v457
    %v459 = vrot.slane %v458, 4
    %v460 = vmax.f32 %v458, %v459
    %v461 = vrot.slane %v460, 2
    %v462 = vmax.f32 %v460, %v461
    %v463 = vrot.slane %v462, 1
    %v464 = vmax.f32 %v462, %v463
    %v465 = vadd.f32 %v227, %v455
    %v466 = vadd.f32 %v236, %v464
    %467 = vmatprep.subr.bf16.mxu0 0
    %468 = vmatpush1.bf16.msra.mxu0 %v373
    %469 = vmatprep.subr.bf16.mxu0 0
    %470 = vmatpush1.bf16.msra.mxu0 %v374
    %471 = vmatprep.subr.bf16.mxu0 0
    %472 = vmatpush1.bf16.msra.mxu0 0
    %473 = vmatprep.subr.bf16.mxu0 0
    %474 = vmatpush1.bf16.msra.mxu0 0
    %475 = vmatprep.subr.bf16.mxu0 0
    %476 = vmatpush1.bf16.msra.mxu0 0
    %477 = vmatprep.subr.bf16.mxu0 0
    %478 = vmatpush1.bf16.msra.mxu0 0
    %479 = vmatprep.subr.bf16.mxu0 0
    %480 = vmatpush1.bf16.msra.mxu0 0
    %481 = vmatprep.subr.bf16.mxu0 0
    %482 = vmatpush1.bf16.msra.mxu0 0
    %483 = vmatprep.subr.bf16.mxu0 0
    %484 = vmatpush1.bf16.msra.mxu0 0
    %485 = vmatprep.subr.bf16.mxu0 0
    %486 = vmatpush1.bf16.msra.mxu0 0
    %487 = vmatprep.subr.bf16.mxu0 0
    %488 = vmatpush1.bf16.msra.mxu0 0
    %489 = vmatprep.subr.bf16.mxu0 0
    %490 = vmatpush1.bf16.msra.mxu0 0
    %491 = vmatprep.subr.bf16.mxu0 0
    %492 = vmatpush1.bf16.msra.mxu0 0
    %493 = vmatprep.subr.bf16.mxu0 0
    %494 = vmatpush1.bf16.msra.mxu0 0
    %495 = vmatprep.subr.bf16.mxu0 0
    %496 = vmatpush1.bf16.msra.mxu0 0
    %497 = vmatprep.subr.bf16.mxu0 0
    %498 = vmatpush1.bf16.msra.mxu0 0
    %499 = vmatprep.mubr.bf16.mxu0 0
    %500 = vmatmul.mubr.bf16.gmra.mrb[0].mxu0 %v249
    %v501 = vpop.f32.mrb[0].mxu0
    %v502 = vadd.f32 %v359, %v501
    %v503 = vpop.f32.mrb[0].mxu0
    %v504 = vpop.f32.mrb[0].mxu0
    %v505 = vadd.f32 %v362, %v504
    %v506 = vpop.f32.mrb[0].mxu0
    %507 = vmatprep.mubr.bf16.mxu0 0
    %508 = vmatmul.mubr.bf16.gmra.mrb[0].mxu0 %v252
    %v509 = vpop.f32.mrb[0].mxu0
    %v510 = vadd.f32 %v367, %v509
    %v511 = vpop.f32.mrb[0].mxu0
    %v512 = vpop.f32.mrb[0].mxu0
    %v513 = vadd.f32 %v370, %v512
    %v514 = vpop.f32.mrb[0].mxu0
    %515 = vdwg.mxu0
    %v516 = vpack.c.bf16 %v505, %v502
    %v517 = vpack.c.bf16 %v513, %v510
    %v518 = vld [vmem:[%s2 + $0x20] sm:$0xf]
    %v519 = vld [vmem:[%s2 + $0x24] sm:$0xf]
    %v520 = vld [vmem:[%s3 + $0x4] sm:$0x1]
    %v521 = vlaneseq
    %v522 = vshrl.u32 %v521, 7
    %v523 = vsub.s32 0, %v522
    %v524 = vrot.slane %v520, %v523
    %v527 = vunpack.c.l.b16 %v518
    %v528 = vunpack.c.l.b16 %v519
    %v529 = vpack.c.b16 %v528, %v527
    %v532 = vsel %vm52, %v516, 0
    %v535 = vsel %vm52, %v517, 0
    %537 = vmatprep.subr.bf16.mxu0 0
    %538 = vmatpush1.bf16.msra.mxu0 %v529
    %539 = vmatprep.subr.bf16.mxu0 0
    %540 = vmatpush1.bf16.msra.mxu0 0
    %541 = vmatprep.subr.bf16.mxu0 0
    %542 = vmatpush1.bf16.msra.mxu0 0
    %543 = vmatprep.subr.bf16.mxu0 0
    %544 = vmatpush1.bf16.msra.mxu0 0
    %545 = vmatprep.subr.bf16.mxu0 0
    %546 = vmatpush1.bf16.msra.mxu0 0
    %547 = vmatprep.subr.bf16.mxu0 0
    %548 = vmatpush1.bf16.msra.mxu0 0
    %549 = vmatprep.subr.bf16.mxu0 0
    %550 = vmatpush1.bf16.msra.mxu0 0
    %551 = vmatprep.subr.bf16.mxu0 0
    %552 = vmatpush1.bf16.msra.mxu0 0
    %553 = vmatprep.subr.bf16.mxu0 0
    %554 = vmatpush1.bf16.msra.mxu0 0
    %555 = vmatprep.subr.bf16.mxu0 0
    %556 = vmatpush1.bf16.msra.mxu0 0
    %557 = vmatprep.subr.bf16.mxu0 0
    %558 = vmatpush1.bf16.msra.mxu0 0
    %559 = vmatprep.subr.bf16.mxu0 0
    %560 = vmatpush1.bf16.msra.mxu0 0
    %561 = vmatprep.subr.bf16.mxu0 0
    %562 = vmatpush1.bf16.msra.mxu0 0
    %563 = vmatprep.subr.bf16.mxu0 0
    %564 = vmatpush1.bf16.msra.mxu0 0
    %565 = vmatprep.subr.bf16.mxu0 0
    %566 = vmatpush1.bf16.msra.mxu0 0
    %567 = vmatprep.subr.bf16.mxu0 0
    %568 = vmatpush1.bf16.msra.mxu0 0
    %569 = vmatprep.mubr.bf16.mxu0 0
    %570 = vmatmul.mubr.bf16.gmra.mrb[0].mxu0 %v532
    %v571 = vpop.f32.mrb[0].mxu0
    %v572 = vadd.f32 %v524, %v571
    %v573 = vpop.f32.mrb[0].mxu0
    %v574 = vpop.f32.mrb[0].mxu0
    %v575 = vadd.f32 %v524, %v574
    %v576 = vpop.f32.mrb[0].mxu0
    %577 = vmatprep.mubr.bf16.mxu0 0
    %578 = vmatmul.mubr.bf16.gmra.mrb[0].mxu0 %v535
    %v579 = vpop.f32.mrb[0].mxu0
    %v580 = vadd.f32 %v524, %v579
    %v581 = vpop.f32.mrb[0].mxu0
    %v582 = vpop.f32.mrb[0].mxu0
    %v583 = vadd.f32 %v524, %v582
    %v584 = vpop.f32.mrb[0].mxu0
    %585 = vdwg.mxu0
    %v586 = vpack.c.bf16 %v575, %v572
    %v587 = vpack.c.bf16 %v583, %v580
    %v588 = vld [vmem:[%s2 + $0x28] sm:$0xf]
    %v589 = vld [vmem:[%s3 + $0x5] sm:$0x1]
    %v590 = vlaneseq
    %v591 = vshrl.u32 %v590, 7
    %v592 = vsub.s32 0, %v591
    %v593 = vrot.slane %v589, %v592
    %vm594 = vcmask 64512
    %v596 = vsel %vm594, %v586, 0
    %v599 = vsel %vm594, %v587, 0
    %vm601 = vcmask 1043456
    %v603 = vsel %vm601, %v588, 0
    %605 = vmatprep.subr.bf16.mxu0 0
    %606 = vmatpush1.bf16.msra.mxu0 %v603
    %607 = vmatprep.subr.bf16.mxu0 0
    %608 = vmatpush1.bf16.msra.mxu0 0
    %609 = vmatprep.subr.bf16.mxu0 0
    %610 = vmatpush1.bf16.msra.mxu0 0
    %611 = vmatprep.subr.bf16.mxu0 0
    %612 = vmatpush1.bf16.msra.mxu0 0
    %613 = vmatprep.subr.bf16.mxu0 0
    %614 = vmatpush1.bf16.msra.mxu0 0
    %615 = vmatprep.subr.bf16.mxu0 0
    %616 = vmatpush1.bf16.msra.mxu0 0
    %617 = vmatprep.subr.bf16.mxu0 0
    %618 = vmatpush1.bf16.msra.mxu0 0
    %619 = vmatprep.subr.bf16.mxu0 0
    %620 = vmatpush1.bf16.msra.mxu0 0
    %621 = vmatprep.subr.bf16.mxu0 0
    %622 = vmatpush1.bf16.msra.mxu0 0
    %623 = vmatprep.subr.bf16.mxu0 0
    %624 = vmatpush1.bf16.msra.mxu0 0
    %625 = vmatprep.subr.bf16.mxu0 0
    %626 = vmatpush1.bf16.msra.mxu0 0
    %627 = vmatprep.subr.bf16.mxu0 0
    %628 = vmatpush1.bf16.msra.mxu0 0
    %629 = vmatprep.subr.bf16.mxu0 0
    %630 = vmatpush1.bf16.msra.mxu0 0
    %631 = vmatprep.subr.bf16.mxu0 0
    %632 = vmatpush1.bf16.msra.mxu0 0
    %633 = vmatprep.subr.bf16.mxu0 0
    %634 = vmatpush1.bf16.msra.mxu0 0
    %635 = vmatprep.subr.bf16.mxu0 0
    %636 = vmatpush1.bf16.msra.mxu0 0
    %637 = vmatprep.mubr.bf16.mxu0 0
    %638 = vmatmul.mubr.bf16.gmra.mrb[0].mxu0 %v596
    %v639 = vpop.f32.mrb[0].mxu0
    %v640 = vadd.f32 %v593, %v639
    %v641 = vpop.f32.mrb[0].mxu0
    %v642 = vpop.f32.mrb[0].mxu0
    %v643 = vadd.f32 %v593, %v642
    %v644 = vpop.f32.mrb[0].mxu0
    %645 = vmatprep.mubr.bf16.mxu0 0
    %646 = vmatmul.mubr.bf16.gmra.mrb[0].mxu0 %v599
    %v647 = vpop.f32.mrb[0].mxu0
    %v648 = vadd.f32 %v593, %v647
    %v649 = vpop.f32.mrb[0].mxu0
    %v650 = vpop.f32.mrb[0].mxu0
    %v651 = vadd.f32 %v593, %v650
    %v652 = vpop.f32.mrb[0].mxu0
    %653 = vdwg.mxu0
    %v654 = vadd.f32 %v443, %v640
    %v655 = vadd.f32 %v444, %v643
    %v656 = vadd.f32 %v445, %v648
    %v657 = vadd.f32 %v446, %v651
    %v658 = vsel %vm218, %v640, -inf
    %v659 = vsel %vm218, %v643, -inf
    %v660 = vmax.f32 %v658, %v659
    %v661 = vrot.slane %v660, 4
    %v662 = vmax.f32 %v660, %v661
    %v663 = vrot.slane %v662, 2
    %v664 = vmax.f32 %v662, %v663
    %v665 = vrot.slane %v664, 1
    %v666 = vmax.f32 %v664, %v665
    %v667 = vsel %vm218, %v648, -inf
    %v668 = vsel %vm218, %v651, -inf
    %v669 = vmax.f32 %v667, %v668
    %v670 = vrot.slane %v669, 4
    %v671 = vmax.f32 %v669, %v670
    %v672 = vrot.slane %v671, 2
    %v673 = vmax.f32 %v671, %v672
    %v674 = vrot.slane %v673, 1
    %v675 = vmax.f32 %v673, %v674
    %v676 = vadd.f32 %v465, %v666
    %v677 = vadd.f32 %v466, %v675
    %vm678 = vcmask 1040384
    %v679 = vsel %vm678, %v676, %v677
    %vm680 = vcmask 25600
    %681 = vst.msk [vmem:[#allocation2] sm:$0x3] %vm680, %v679
    %686 = vrot.lane.b32.xlu0 %v572, 4
    %v687 = vpop.permute.xlu0 %686
    %688 = vrot.lane.b32.xlu0 %v575, 4
    %v689 = vpop.permute.xlu0 %688
    %690 = vrot.lane.b32.xlu0 %v580, 4
    %v691 = vpop.permute.xlu0 %690
    %692 = vrot.lane.b32.xlu0 %v583, 4
    %v693 = vpop.permute.xlu0 %692
    %v698 = vsel %vm218, %v654, %v687
    %v699 = vsel %vm218, %v655, %v689
    %v700 = vsel %vm218, %v656, %v691
    %v701 = vsel %vm218, %v657, %v693
    %vm702 = vcmask 97280
    %703 = vst.msk [vmem:[%s5] sm:$0xff] %vm702, %v698
    %704 = vst.msk [vmem:[%s5 + $0x8] sm:$0xff] %vm702, %v699
    %705 = vst.msk [vmem:[%s5 + $0x10] sm:$0xff] %vm702, %v700
    %706 = vst.msk [vmem:[%s5 + $0x18] sm:$0xff] %vm702, %v701
    // Predicated region
    $region18: #{slidegraph_forward_pallas.1} parent=1 // pred_check
      _
    $region19: #{slidegraph_forward_pallas.1} parent=1 // pred_check_branch
      %708 = sbr.rel (0) target = $region21
    $region20: #{slidegraph_forward_pallas.1} parent=1 // pred_region
      %s710 = ssub.s32 32, 32
      %711 = vsyncadd [#allocation3], %s710
      %s713 = sshll.u32 [#allocation2], 4
      %s714 = int_to_ptr.vmem [resolvable:$true] %s713
      %716 = dma.vmem_to_hbm [thread:$0]  %s714, 32, %s4, [#allocation3]
    $region21: #{slidegraph_forward_pallas.1} parent=1 // pred_fallthru
      _
    // Predicated region
    $region22: #{slidegraph_forward_pallas.1} parent=1 // pred_check
      _
    $region23: #{slidegraph_forward_pallas.1} parent=1 // pred_check_branch
      %718 = sbr.rel (0) target = $region25
    $region24: #{slidegraph_forward_pallas.1} parent=1 // pred_region
      _
    $region25: #{slidegraph_forward_pallas.1} parent=1 // pred_fallthru
      _
    // Predicated region
    $region26: #{slidegraph_forward_pallas.1} parent=1 // pred_check
      _
    $region27: #{slidegraph_forward_pallas.1} parent=1 // pred_check_branch
      %720 = sbr.rel (0) target = $region29
    $region28: #{slidegraph_forward_pallas.1} parent=1 // pred_region
      %721 = dma.done [#allocation3], 32
    $region29: #{slidegraph_forward_pallas.1} parent=1 // pred_fallthru
      _
    // Predicated region
    $region30: #{slidegraph_forward_pallas.1} parent=1 // pred_check
      _
    $region31: #{slidegraph_forward_pallas.1} parent=1 // pred_check_branch
      %723 = sbr.rel (0) target = $region33
    $region32: #{slidegraph_forward_pallas.1} parent=1 // pred_region
      _
    $region33: #{slidegraph_forward_pallas.1} parent=1 // pred_fallthru
      _
    %724 = vsyncpa [#allocation3], 1

</llo_original>
